<compile_context>
chip_gen: v7x
topology: tpu7x:2x2x1
jax: 0.10.0
libtpu: 0.0.40
codegen_flags: <defaults>
</compile_context>

<pallas_src>
import jax
import jax.numpy as jnp
from jax.experimental import pallas as pl
from jax.experimental.pallas import tpu as pltpu


def _round_up(x, m):
    return (x + m - 1) // m * m


def _score_kernel(u_ref, i_ref, j_ref, out_ref):
    # u_ref/i_ref/j_ref: (D, TB) VMEM tiles (batch on lanes).
    # out_ref: (2, TB) lane-dense tile; row 0 = pos score, row 1 = neg score.
    u = u_ref[...].astype(jnp.float32)
    i = i_ref[...].astype(jnp.float32)
    j = j_ref[...].astype(jnp.float32)
    pos = jnp.sum(u * i, axis=0, keepdims=True)   # (1, TB) sublane reduction
    neg = jnp.sum(u * j, axis=0, keepdims=True)   # (1, TB)
    # Single full-tile store (one unmasked vst per vreg column).
    out_ref[...] = jnp.concatenate([pos, neg], axis=0)


def bpr_scores(u, i, j, *, max_tb=16384, min_steps=2,
               vmem_budget_bytes=20 * 1024 * 1024):
    """Compute (pos_score, neg_score), each (B, 1) float32, with a Pallas kernel.

    u, i, j: gathered embeddings of shape (B, D) (any float dtype).
    max_tb:  upper bound on the batch tile (lane axis); the actual tile is
             derived from B, the VMEM budget and min_steps, always a multiple
             of 128.
    min_steps: minimum number of grid steps when B is large enough (>=2 so
             v7x can shard the parallel batch axis across its two TCs).
    """
    B, D = u.shape
    itemsize = jnp.dtype(u.dtype).itemsize

    # Batch on the lane axis: (D, B).  XLA fuses gather + transpose (+pad)
    # into a single producer, which allow_input_fusion below lets it fuse into
    # the pallas_call operands (no extra HBM round trip).
    ut = u.T
    it = i.T
    jt = j.T

    # Tile cap: 3 inputs x 2 pipeline buffers of (D, tb) in the input dtype
    # (+ the tiny (2, tb) f32 output) must stay within the VMEM budget, which
    # is chosen to be safe across v5e/v6e (128 MiB) and v7x (64 MiB physical,
    # 32 MiB scoped default).  Also cap at max_tb so per-step HBM traffic sits
    # in the few-MiB sweet spot and large B still yields many parallel steps.
    bytes_per_col = 3 * 2 * D * itemsize + 2 * 2 * 4
    tb_cap = max(128, (vmem_budget_bytes // max(bytes_per_col, 1)) // 128 * 128)
    tb_cap = min(tb_cap, max(128, _round_up(int(max_tb), 128)))

    # Derive the tile from the batch so padding stays small and (for large B)
    # the grid has at least `min_steps` steps.
    B128 = _round_up(B, 128)
    nsteps = max(int(min_steps), pl.cdiv(B128, tb_cap))
    tb = min(tb_cap, _round_up(pl.cdiv(B, nsteps), 128))

    Bp = _round_up(B, tb)
    if Bp != B:
        pad = ((0, 0), (0, Bp - B))
        ut = jnp.pad(ut, pad)
        it = jnp.pad(it, pad)
        jt = jnp.pad(jt, pad)

    grid = (Bp // tb,)
    in_spec = pl.BlockSpec((D, tb), lambda b: (0, b))
    out_spec = pl.BlockSpec((2, tb), lambda b: (0, b))

    cost = pl.CostEstimate(
        flops=4 * Bp * D,
        transcendentals=0,
        bytes_accessed=3 * Bp * D * itemsize + 2 * Bp * 4,
    )

    scores = pl.pallas_call(
        _score_kernel,
        out_shape=jax.ShapeDtypeStruct((2, Bp), jnp.float32),
        grid_spec=pltpu.PrefetchScalarGridSpec(
            num_scalar_prefetch=0,
            grid=grid,
            in_specs=[in_spec, in_spec, in_spec],
            out_specs=out_spec,
        ),
        compiler_params=pltpu.CompilerParams(
            dimension_semantics=("parallel",),
            vmem_limit_bytes=32 * 1024 * 1024,
            allow_input_fusion=[True, True, True],
        ),
        cost_estimate=cost,
    )(ut, it, jt)

    pos_score = scores[0, :B].reshape(B, 1)
    neg_score = scores[1, :B].reshape(B, 1)
    return pos_score, neg_score


class BaseModel:
    """JAX/Pallas port of the PyTorch Base_model."""

    def __init__(self, user_num, item_num, dim, key):
        self.user_num = user_num
        self.item_num = item_num
        self.dim = dim
        ku, ki = jax.random.split(key)
        # nn.init.normal_(..., mean=0.0, std=0.01).  Stored as bf16 to halve
        # HBM traffic on the bandwidth-bound score path; the kernel upcasts to
        # f32 before the multiply/reduce (numerics within ~1e-3 of f32 storage).
        self.user_emb = (0.01 * jax.random.normal(
            ku, (user_num, dim), jnp.float32)).astype(jnp.bfloat16)
        self.item_emb = (0.01 * jax.random.normal(
            ki, (item_num, dim), jnp.float32)).astype(jnp.bfloat16)
        self.user_list = jnp.arange(user_num, dtype=jnp.int32)
        self.item_list = jnp.arange(item_num, dtype=jnp.int32)

    def forward(self, batch_user, batch_pos_item, batch_neg_item, **kw):
        u = self.user_emb[batch_user]          # (B, dim)
        i = self.item_emb[batch_pos_item]      # (B, dim)
        j = self.item_emb[batch_neg_item]      # (B, dim)
        pos_score, neg_score = bpr_scores(u, i, j, **kw)
        return (pos_score, neg_score)

    def get_loss(self, output):
        pos_score, neg_score = output
        # Numerically stable form of -sum(log(sigmoid(pos - neg))).
        return -jnp.sum(jax.nn.log_sigmoid(pos_score - neg_score))

    def get_embedding(self):
        return (self.user_emb[self.user_list], self.item_emb[self.item_list])


def _ref_scores(model, bu, bp, bn):
    u = model.user_emb[bu].astype(jnp.float32)
    i = model.item_emb[bp].astype(jnp.float32)
    j = model.item_emb[bn].astype(jnp.float32)
    return (jnp.sum(u * i, axis=1, keepdims=True),
            jnp.sum(u * j, axis=1, keepdims=True))


if __name__ == "__main__":
    key = jax.random.PRNGKey(0)
    k_model, k_u, k_p, k_n = jax.random.split(key, 4)

    user_num, item_num, dim, batch = 16, 32, 32, 8
    model = BaseModel(user_num, item_num, dim, k_model)

    batch_user = jax.random.randint(k_u, (batch,), 0, user_num, dtype=jnp.int32)
    batch_pos = jax.random.randint(k_p, (batch,), 0, item_num, dtype=jnp.int32)
    batch_neg = jax.random.randint(k_n, (batch,), 0, item_num, dtype=jnp.int32)

    pos_score, neg_score = model.forward(batch_user, batch_pos, batch_neg)
    jax.block_until_ready((pos_score, neg_score))

    # Reference check against plain JAX (same bf16 embeddings, f32 math).
    ref_pos, ref_neg = _ref_scores(model, batch_user, batch_pos, batch_neg)
    assert pos_score.shape == (batch, 1) and neg_score.shape == (batch, 1)
    assert jnp.allclose(pos_score, ref_pos, atol=1e-5)
    assert jnp.allclose(neg_score, ref_neg, atol=1e-5)

    # Second check: non-multiple-of-tile batch producing a multi-step grid
    # (exercises padding + pipelined tiles + the min_steps=2 split).
    batch2 = 300
    ku2, kp2, kn2 = jax.random.split(jax.random.PRNGKey(1), 3)
    bu2 = jax.random.randint(ku2, (batch2,), 0, user_num, dtype=jnp.int32)
    bp2 = jax.random.randint(kp2, (batch2,), 0, item_num, dtype=jnp.int32)
    bn2 = jax.random.randint(kn2, (batch2,), 0, item_num, dtype=jnp.int32)
    ps2, ns2 = model.forward(bu2, bp2, bn2)
    jax.block_until_ready((ps2, ns2))
    rp2, rn2 = _ref_scores(model, bu2, bp2, bn2)
    assert ps2.shape == (batch2, 1) and ns2.shape == (batch2, 1)
    assert jnp.allclose(ps2, rp2, atol=1e-5)
    assert jnp.allclose(ns2, rn2, atol=1e-5)

    # Loss path (stable log-sigmoid).
    loss = model.get_loss((pos_score, neg_score))
    jax.block_until_ready(loss)

    print("KERNEL_OK")
</pallas_src>

<mosaic_0001>
module attributes {stable_mosaic.version = 11 : i64} {
  func.func @_score_kernel(%arg0: i32, %arg1: memref<32x128xbf16, #tpu.memory_space<vmem>>, %arg2: memref<32x128xbf16, #tpu.memory_space<vmem>>, %arg3: memref<32x128xbf16, #tpu.memory_space<vmem>>, %arg4: memref<2x128xf32, #tpu.memory_space<vmem>>) attributes {dimension_semantics = [#tpu.dimension_semantics<parallel>], iteration_bounds = array<i64: 1>, scalar_prefetch = 0 : i64, scratch_operands = 0 : i64, tpu.core_type = #tpu.core_type<tc>, window_params = [{transform_indices = @transform_0, window_bounds = array<i64: 32, 128>}, {transform_indices = @transform_1, window_bounds = array<i64: 32, 128>}, {transform_indices = @transform_2, window_bounds = array<i64: 32, 128>}, {transform_indices = @transform_3, window_bounds = array<i64: 2, 128>}]} {
    %c0 = arith.constant 0 : index
    %c0_0 = arith.constant 0 : index
    %0 = vector.load %arg1[%c0, %c0_0] : memref<32x128xbf16, #tpu.memory_space<vmem>>, vector<32x128xbf16>
    %1 = arith.extf %0 : vector<32x128xbf16> to vector<32x128xf32>
    %c0_1 = arith.constant 0 : index
    %c0_2 = arith.constant 0 : index
    %2 = vector.load %arg2[%c0_1, %c0_2] : memref<32x128xbf16, #tpu.memory_space<vmem>>, vector<32x128xbf16>
    %3 = arith.extf %2 : vector<32x128xbf16> to vector<32x128xf32>
    %c0_3 = arith.constant 0 : index
    %c0_4 = arith.constant 0 : index
    %4 = vector.load %arg3[%c0_3, %c0_4] : memref<32x128xbf16, #tpu.memory_space<vmem>>, vector<32x128xbf16>
    %5 = arith.extf %4 : vector<32x128xbf16> to vector<32x128xf32>
    %6 = arith.mulf %1, %3 : vector<32x128xf32>
    %cst = arith.constant dense<0.000000e+00> : vector<128xf32>
    %7 = vector.multi_reduction <add>, %6, %cst [0] : vector<32x128xf32> to vector<128xf32>
    %8 = vector.shape_cast %7 : vector<128xf32> to vector<1x128xf32>
    %9 = arith.mulf %1, %5 : vector<32x128xf32>
    %cst_5 = arith.constant dense<0.000000e+00> : vector<128xf32>
    %10 = vector.multi_reduction <add>, %9, %cst_5 [0] : vector<32x128xf32> to vector<128xf32>
    %11 = vector.shape_cast %10 : vector<128xf32> to vector<1x128xf32>
    %12 = tpu.concatenate %8, %11 in 0 : vector<1x128xf32>, vector<1x128xf32> -> vector<2x128xf32>
    %c0_6 = arith.constant 0 : index
    %c0_7 = arith.constant 0 : index
    %13 = vector.load %arg4[%c0_6, %c0_7] : memref<2x128xf32, #tpu.memory_space<vmem>>, vector<2x128xf32>
    tpu.vector_store %arg4[%c0_6, %c0_7], %12 {strides = array<i32>} : memref<2x128xf32, #tpu.memory_space<vmem>>, vector<2x128xf32>,
    return
  }
  func.func @transform_0(%arg0: i32) -> (i32, i32) {
    %c0_i32 = arith.constant 0 : i32
    %c0_i32_0 = arith.constant 0 : i32
    return %c0_i32, %arg0 : i32, i32
  }
  func.func @transform_1(%arg0: i32) -> (i32, i32) {
    %c0_i32 = arith.constant 0 : i32
    %c0_i32_0 = arith.constant 0 : i32
    return %c0_i32, %arg0 : i32, i32
  }
  func.func @transform_2(%arg0: i32) -> (i32, i32) {
    %c0_i32 = arith.constant 0 : i32
    %c0_i32_0 = arith.constant 0 : i32
    return %c0_i32, %arg0 : i32, i32
  }
  func.func @transform_3(%arg0: i32) -> (i32, i32) {
    %c0_i32 = arith.constant 0 : i32
    %c0_i32_0 = arith.constant 0 : i32
    return %c0_i32, %arg0 : i32, i32
  }
}

</mosaic_0001>

<llo_original>
// kernel: tpu_custom_call.1
$region0: #{tpu_custom_call.1}
  #allocation0 [shape = 'u32[]', space=smem, size = 0x4, offset = 0x4, fixed_abs, tag = 'smem constant byte address 0x4 - core index']
  #allocation1 [shape = 'u32[144,128]{1,0:T(1,128)}', space=vmem, size = 0x12000, scoped, tag = 'internal scratch']
  %s0 = inlined_call_operand.hbm [shape: bf16[32,128], index: 0, kind: input, shape index: {}]
  %s1 = inlined_call_operand.hbm [shape: bf16[32,128], index: 1, kind: input, shape index: {}]
  %s2 = inlined_call_operand.hbm [shape: bf16[32,128], index: 2, kind: input, shape index: {}]
  %s3 = inlined_call_operand.hbm [shape: f32[2,128], index: 3, kind: output, shape index: {}]
  %s4 = sld [smem:[#allocation0]]
  $region34: #{tpu_custom_call.1} parent=0
    _
  %s6 = ssub.s32 1, %s4
  %s7 = scalar_select 0, %s6, %s4
  $region1: #{tpu_custom_call.1} parent=0
    #allocation2 [shape = 'u8[8192]{0}', space=vmem, size = 0x2000, scoped, tag = 'input window, operand 0, single buffered']
    #allocation3 [shape = 's32[1]{0}', space=sflag, size = 0x4, scoped, tag = 'scoped memory for tpu_custom_call.1']
    #allocation4 [shape = 's32[1]{0}', space=sflag, size = 0x4, scoped, tag = 'scoped memory for tpu_custom_call.1']
    #allocation5 [shape = 'u8[8192]{0}', space=vmem, size = 0x2000, scoped, tag = 'input window, operand 1, single buffered']
    #allocation6 [shape = 's32[1]{0}', space=sflag, size = 0x4, scoped, tag = 'scoped memory for tpu_custom_call.1']
    #allocation7 [shape = 'u8[8192]{0}', space=vmem, size = 0x2000, scoped, tag = 'input window, operand 2, single buffered']
    #allocation8 [shape = 'u8[1024]{0}', space=vmem, size = 0x400, scoped, tag = 'output window, operand 0, single buffered']
    %8 = vsyncpa [#allocation3], 0
    %9 = vsyncpa [#allocation6], 0
    %10 = vsyncpa [#allocation4], 0
    // Predicated region
    $region2: #{tpu_custom_call.1} parent=1 // pred_check
      _
    $region3: #{tpu_custom_call.1} parent=1 // pred_check_branch
      %12 = sbr.rel (0) target = $region5
    $region4: #{tpu_custom_call.1} parent=1 // pred_region
      %s14 = ssub.s32 256, 256
      %15 = vsyncadd [#allocation3], %s14
      %s16 = sshll.u32 [#allocation2], 4
      %s17 = int_to_ptr.vmem [resolvable:$true] %s16
      %22 = dma.hbm_to_vmem [thread:$0]  %s0, 256, %s17, [#allocation3], 64, 64, 4
    $region5: #{tpu_custom_call.1} parent=1 // pred_fallthru
      _
    // Predicated region
    $region6: #{tpu_custom_call.1} parent=1 // pred_check
      _
    $region7: #{tpu_custom_call.1} parent=1 // pred_check_branch
      %24 = sbr.rel (0) target = $region9
    $region8: #{tpu_custom_call.1} parent=1 // pred_region
      %s26 = ssub.s32 256, 256
      %27 = vsyncadd [#allocation6], %s26
      %s28 = sshll.u32 [#allocation5], 4
      %s29 = int_to_ptr.vmem [resolvable:$true] %s28
      %34 = dma.hbm_to_vmem [thread:$0]  %s1, 256, %s29, [#allocation6], 64, 64, 4
    $region9: #{tpu_custom_call.1} parent=1 // pred_fallthru
      _
    // Predicated region
    $region10: #{tpu_custom_call.1} parent=1 // pred_check
      _
    $region11: #{tpu_custom_call.1} parent=1 // pred_check_branch
      %36 = sbr.rel (0) target = $region13
    $region12: #{tpu_custom_call.1} parent=1 // pred_region
      %s38 = ssub.s32 256, 256
      %39 = vsyncadd [#allocation6], %s38
      %s40 = sshll.u32 [#allocation7], 4
      %s41 = int_to_ptr.vmem [resolvable:$true] %s40
      %46 = dma.hbm_to_vmem [thread:$0]  %s2, 256, %s41, [#allocation6], 64, 64, 4
    $region13: #{tpu_custom_call.1} parent=1 // pred_fallthru
      _
    // Predicated region
    $region14: #{tpu_custom_call.1} parent=1 // pred_check
      _
    $region15: #{tpu_custom_call.1} parent=1 // pred_check_branch
      %48 = sbr.rel (0) target = $region17
    $region16: #{tpu_custom_call.1} parent=1 // pred_region
      %49 = dma.done [#allocation3], 256
    $region17: #{tpu_custom_call.1} parent=1 // pred_fallthru
      _
    // Predicated region
    $region18: #{tpu_custom_call.1} parent=1 // pred_check
      _
    $region19: #{tpu_custom_call.1} parent=1 // pred_check_branch
      %51 = sbr.rel (0) target = $region21
    $region20: #{tpu_custom_call.1} parent=1 // pred_region
      %52 = dma.done [#allocation6], 256
    $region21: #{tpu_custom_call.1} parent=1 // pred_fallthru
      _
    // Predicated region
    $region22: #{tpu_custom_call.1} parent=1 // pred_check
      _
    $region23: #{tpu_custom_call.1} parent=1 // pred_check_branch
      %54 = sbr.rel (0) target = $region25
    $region24: #{tpu_custom_call.1} parent=1 // pred_region
      %55 = dma.done [#allocation6], 256
    $region25: #{tpu_custom_call.1} parent=1 // pred_fallthru
      _
    %v56 = vld [vmem:[#allocation2] sm:$0xf]
    %v57 = vld [vmem:[#allocation2 + $0x4] sm:$0xf]
    %v58 = vld [vmem:[#allocation2 + $0x8] sm:$0xf]
    %v59 = vld [vmem:[#allocation2 + $0xc] sm:$0xf]
    %v60 = vunpack.c.l.bf16 %v56
    %v61 = vunpack.c.l.bf16 %v57
    %v62 = vunpack.c.l.bf16 %v58
    %v63 = vunpack.c.l.bf16 %v59
    %v64 = vld [vmem:[#allocation5] sm:$0xf]
    %v65 = vld [vmem:[#allocation5 + $0x4] sm:$0xf]
    %v66 = vld [vmem:[#allocation5 + $0x8] sm:$0xf]
    %v67 = vld [vmem:[#allocation5 + $0xc] sm:$0xf]
    %v68 = vunpack.c.l.bf16 %v64
    %v69 = vunpack.c.l.bf16 %v65
    %v70 = vunpack.c.l.bf16 %v66
    %v71 = vunpack.c.l.bf16 %v67
    %v72 = vld [vmem:[#allocation7] sm:$0xf]
    %v73 = vld [vmem:[#allocation7 + $0x4] sm:$0xf]
    %v74 = vld [vmem:[#allocation7 + $0x8] sm:$0xf]
    %v75 = vld [vmem:[#allocation7 + $0xc] sm:$0xf]
    %v76 = vunpack.c.l.bf16 %v72
    %v77 = vunpack.c.l.bf16 %v73
    %v78 = vunpack.c.l.bf16 %v74
    %v79 = vunpack.c.l.bf16 %v75
    %v80 = vmul.f32 %v60, %v68
    %v81 = vmul.f32 %v61, %v69
    %v82 = vmul.f32 %v62, %v70
    %v83 = vmul.f32 %v63, %v71
    %v84 = vadd.f32 %v80, %v81
    %v85 = vadd.f32 %v84, %v82
    %v86 = vadd.f32 %v85, %v83
    %v87 = vrot.slane %v86, 4
    %v88 = vadd.f32 %v86, %v87
    %v89 = vrot.slane %v88, 2
    %v90 = vadd.f32 %v88, %v89
    %v91 = vrot.slane %v90, 1
    %v92 = vadd.f32 %v90, %v91
    %v93 = vmul.f32 %v60, %v76
    %v94 = vmul.f32 %v61, %v77
    %v95 = vmul.f32 %v62, %v78
    %v96 = vmul.f32 %v63, %v79
    %v97 = vadd.f32 %v93, %v94
    %v98 = vadd.f32 %v97, %v95
    %v99 = vadd.f32 %v98, %v96
    %v100 = vrot.slane %v99, 4
    %v101 = vadd.f32 %v99, %v100
    %v102 = vrot.slane %v101, 2
    %v103 = vadd.f32 %v101, %v102
    %v104 = vrot.slane %v103, 1
    %v105 = vadd.f32 %v103, %v104
    %vm106 = vcmask 1040384
    %v107 = vsel %vm106, %v92, %v105
    %108 = vst [vmem:[#allocation8] sm:$0x3] %v107
    // Predicated region
    $region26: #{tpu_custom_call.1} parent=1 // pred_check
      _
    $region27: #{tpu_custom_call.1} parent=1 // pred_check_branch
      %110 = sbr.rel (0) target = $region29
    $region28: #{tpu_custom_call.1} parent=1 // pred_region
      %s112 = ssub.s32 32, 32
      %113 = vsyncadd [#allocation4], %s112
      %s115 = sshll.u32 [#allocation8], 4
      %s116 = int_to_ptr.vmem [resolvable:$true] %s115
      %118 = dma.vmem_to_hbm [thread:$0]  %s116, 32, %s3, [#allocation4]
    $region29: #{tpu_custom_call.1} parent=1 // pred_fallthru
      _
    // Predicated region
    $region30: #{tpu_custom_call.1} parent=1 // pred_check
      _
    $region31: #{tpu_custom_call.1} parent=1 // pred_check_branch
      %120 = sbr.rel (0) target = $region33
    $region32: #{tpu_custom_call.1} parent=1 // pred_region
      %121 = dma.done [#allocation4], 32
    $region33: #{tpu_custom_call.1} parent=1 // pred_fallthru
      _
    %122 = vsyncpa [#allocation3], 1
    %123 = vsyncpa [#allocation6], 1
    %124 = vsyncpa [#allocation4], 1

</llo_original>
